<compile_context>
chip_gen: v5e
topology: v5e:2x2
jax: 0.10.0
libtpu: 0.0.40
codegen_flags: <defaults>
</compile_context>

<pallas_src>
import jax
import jax.numpy as jnp
from jax.experimental import pallas as pl
from jax.experimental.pallas import tpu as pltpu


def _repeat_kernel(x_ref, o_ref):
    # x_ref: (tr, lane) input tile; o_ref: (num_channels, tr, lane) output tile.
    x = x_ref[...]
    for r in range(o_ref.shape[0]):  # num_channels is small & static -> unrolled
        o_ref[r] = x


def _vmem_budget_bytes() -> int:
    """Per-chip scoped-VMEM budget (leave headroom below physical capacity)."""
    try:
        cap = int(pltpu.get_tpu_info().vmem_capacity_bytes)
    except Exception:
        cap = 64 * 1024 * 1024  # conservative (v7x-sized) fallback
    return min((cap * 3) // 4, 96 * 1024 * 1024)


def _choose_layout(n_pad: int, dtype, tile_bytes: int, lane_cap: int = 1024):
    """Pick a lane-dense (rows, lane) view of the padded flat input + row tile."""
    itemsize = jnp.dtype(dtype).itemsize
    sub = max(8, 32 // itemsize)          # packed sublane multiple (8/16/32)
    lane = 128
    while lane * 2 <= lane_cap and n_pad % (lane * 2) == 0:
        lane *= 2
    rows = n_pad // lane
    row_bytes = lane * itemsize
    total_bytes = rows * row_bytes

    # Row budget from the per-tile byte budget, rounded to packed sublanes.
    target = max(sub, (tile_bytes // row_bytes) // sub * sub)

    # For inputs big enough to care, keep >= 2 row tiles so the "parallel"
    # axis can be sharded across both TensorCores on v7x.
    if total_bytes >= (1 << 20) and rows >= 2 * sub:
        target = min(target, max(sub, (rows // 2) // sub * sub))

    if rows <= target or rows < 2 * sub:
        return rows, lane, rows            # single full-extent row block

    # Prefer a tr that divides rows evenly -> every step is a full, unmasked tile.
    tr = target
    if rows % sub == 0:
        for cand in range(target, sub - 1, -sub):
            if rows % cand == 0:
                tr = cand
                break
    return rows, lane, tr


def mono_to_color(x: jax.Array, num_channels: int = 3, *,
                  tile_bytes: int | None = None,
                  min_pallas_bytes: int = 64 * 1024) -> jax.Array:
    """Pallas implementation of MonoToColor.forward (torch repeat(n, 1, 1))."""
    assert x.ndim == 3, "expected (C, H, W) input"
    assert num_channels >= 1
    c, h, w = x.shape
    n = c * h * w
    itemsize = jnp.dtype(x.dtype).itemsize

    # Tiny-input fast path: launch/pipeline overhead would dominate.
    if n == 0 or n * itemsize < min_pallas_bytes:
        return jnp.tile(x, (num_channels, 1, 1))

    budget = _vmem_budget_bytes()
    if tile_bytes is None:
        # Double-buffered input + (num_channels-wide) output must fit the budget.
        tile_bytes = int(min(8 << 20, max(1 << 20, budget // (2 * (num_channels + 1)))))

    # Pad the flat view to a multiple of 128 so every tile is lane-dense.
    n_pad = -(-n // 128) * 128
    rows, lane, tr = _choose_layout(n_pad, x.dtype, tile_bytes)

    xf = x.reshape(-1)
    if n_pad != n:
        xf = jnp.pad(xf, (0, n_pad - n))
    x2 = xf.reshape(rows, lane)            # contiguous row-major view

    num_row_tiles = pl.cdiv(rows, tr)
    footprint = 2 * (num_channels + 1) * tr * lane * itemsize  # dbl-buffered in+out
    vmem_limit = int(max(32 << 20, footprint + (2 << 20)))

    out2 = pl.pallas_call(
        _repeat_kernel,
        out_shape=jax.ShapeDtypeStruct((num_channels, rows, lane), x.dtype),
        grid_spec=pltpu.PrefetchScalarGridSpec(
            num_scalar_prefetch=0,
            grid=(num_row_tiles,),
            # One input tile per step, written to all num_channels replicas.
            in_specs=[pl.BlockSpec((tr, lane), lambda i: (i, 0))],
            out_specs=pl.BlockSpec((num_channels, tr, lane), lambda i: (0, i, 0)),
        ),
        compiler_params=pltpu.CompilerParams(
            dimension_semantics=("parallel",),
            vmem_limit_bytes=vmem_limit,
        ),
        cost_estimate=pl.CostEstimate(
            flops=0,
            transcendentals=0,
            bytes_accessed=(1 + num_channels) * n_pad * itemsize,
        ),
    )(x2)

    # (num_channels, rows, lane) is contiguous flat replicas; drop padding and
    # reshape back -> out[r*C + c] == x[c], exactly torch's repeat(n, 1, 1).
    out_flat = out2.reshape(num_channels, n_pad)[:, :n]
    return out_flat.reshape(num_channels * c, h, w)


if __name__ == "__main__":
    key = jax.random.PRNGKey(0)
    k1, k2, k3, k4 = jax.random.split(key, 4)

    # 1) Mono spectrogram-like input: lane-dense Pallas path, single row tile.
    x1 = jax.random.normal(k1, (1, 128, 160), dtype=jnp.float32)   # 80 KiB
    out1 = jax.block_until_ready(mono_to_color(x1, num_channels=3))
    assert out1.shape == (3, 128, 160) and out1.dtype == x1.dtype
    assert jnp.array_equal(out1, jnp.tile(x1, (3, 1, 1)))

    # 2) Multi-channel input, small tile budget forces a multi-tile grid.
    x2 = jax.random.normal(k2, (2, 128, 256), dtype=jnp.float32)   # 256 KiB
    out2 = jax.block_until_ready(
        mono_to_color(x2, num_channels=3, tile_bytes=64 * 1024))
    assert out2.shape == (6, 128, 256) and out2.dtype == x2.dtype
    assert jnp.array_equal(out2, jnp.tile(x2, (3, 1, 1)))

    # 3) Odd total size -> padded lane-dense path (forced through Pallas).
    x3 = jax.random.normal(k3, (1, 37, 53), dtype=jnp.float32)
    out3 = jax.block_until_ready(
        mono_to_color(x3, num_channels=3, min_pallas_bytes=0))
    assert out3.shape == (3, 37, 53) and out3.dtype == x3.dtype
    assert jnp.array_equal(out3, jnp.tile(x3, (3, 1, 1)))

    # 4) bf16 input: tiny-input fast path (jnp.tile dispatch).
    x4 = jax.random.normal(k4, (1, 64, 128), dtype=jnp.bfloat16)
    out4 = jax.block_until_ready(mono_to_color(x4, num_channels=3))
    assert out4.shape == (3, 64, 128) and out4.dtype == x4.dtype
    assert jnp.array_equal(out4, jnp.tile(x4, (3, 1, 1)))

    print("KERNEL_OK")
</pallas_src>

<mosaic_0001>
module attributes {stable_mosaic.version = 11 : i64} {
  func.func @_repeat_kernel(%arg0: i32, %arg1: memref<20x1024xf32, #tpu.memory_space<vmem>>, %arg2: memref<3x20x1024xf32, #tpu.memory_space<vmem>>) attributes {dimension_semantics = [#tpu.dimension_semantics<parallel>], iteration_bounds = array<i64: 1>, scalar_prefetch = 0 : i64, scratch_operands = 0 : i64, tpu.core_type = #tpu.core_type<tc>, window_params = [{transform_indices = @transform_0, window_bounds = array<i64: 20, 1024>}, {transform_indices = @transform_1, window_bounds = array<i64: 3, 20, 1024>}]} {
    %c0 = arith.constant 0 : index
    %c0_0 = arith.constant 0 : index
    %0 = vector.load %arg1[%c0, %c0_0] : memref<20x1024xf32, #tpu.memory_space<vmem>>, vector<20x1024xf32>
    %c0_1 = arith.constant 0 : index
    %c0_2 = arith.constant 0 : index
    %c0_3 = arith.constant 0 : index
    %1 = vector.load %arg2[%c0_1, %c0_2, %c0_3] : memref<3x20x1024xf32, #tpu.memory_space<vmem>>, vector<1x20x1024xf32>
    %2 = vector.shape_cast %1 : vector<1x20x1024xf32> to vector<20x1024xf32>
    %3 = vector.shape_cast %0 : vector<20x1024xf32> to vector<1x20x1024xf32>
    tpu.vector_store %arg2[%c0_1, %c0_2, %c0_3], %3 {strides = array<i32>} : memref<3x20x1024xf32, #tpu.memory_space<vmem>>, vector<1x20x1024xf32>,
    %c1 = arith.constant 1 : index
    %c0_4 = arith.constant 0 : index
    %c0_5 = arith.constant 0 : index
    %4 = vector.load %arg2[%c1, %c0_4, %c0_5] : memref<3x20x1024xf32, #tpu.memory_space<vmem>>, vector<1x20x1024xf32>
    %5 = vector.shape_cast %4 : vector<1x20x1024xf32> to vector<20x1024xf32>
    %6 = vector.shape_cast %0 : vector<20x1024xf32> to vector<1x20x1024xf32>
    tpu.vector_store %arg2[%c1, %c0_4, %c0_5], %6 {strides = array<i32>} : memref<3x20x1024xf32, #tpu.memory_space<vmem>>, vector<1x20x1024xf32>,
    %c2 = arith.constant 2 : index
    %c0_6 = arith.constant 0 : index
    %c0_7 = arith.constant 0 : index
    %7 = vector.load %arg2[%c2, %c0_6, %c0_7] : memref<3x20x1024xf32, #tpu.memory_space<vmem>>, vector<1x20x1024xf32>
    %8 = vector.shape_cast %7 : vector<1x20x1024xf32> to vector<20x1024xf32>
    %9 = vector.shape_cast %0 : vector<20x1024xf32> to vector<1x20x1024xf32>
    tpu.vector_store %arg2[%c2, %c0_6, %c0_7], %9 {strides = array<i32>} : memref<3x20x1024xf32, #tpu.memory_space<vmem>>, vector<1x20x1024xf32>,
    return
  }
  func.func @transform_0(%arg0: i32) -> (i32, i32) {
    %c0_i32 = arith.constant 0 : i32
    %c0_i32_0 = arith.constant 0 : i32
    return %arg0, %c0_i32 : i32, i32
  }
  func.func @transform_1(%arg0: i32) -> (i32, i32, i32) {
    %c0_i32 = arith.constant 0 : i32
    %c0_i32_0 = arith.constant 0 : i32
    %c0_i32_1 = arith.constant 0 : i32
    return %c0_i32, %arg0, %c0_i32_0 : i32, i32, i32
  }
}

</mosaic_0001>

<llo_original>
// kernel: tpu_custom_call.1
$region0: #{tpu_custom_call.1}
  #allocation0 [shape = 'u32[]', space=smem, size = 0x4, offset = 0x4, fixed_abs, tag = 'smem constant byte address 0x4 - core index']
  #allocation1 [shape = 'u32[72,128]{1,0:T(1,128)}', space=vmem, size = 0x9000, scoped, tag = 'internal scratch']
  %s0 = inlined_call_operand.hbm [shape: f32[20,1024], index: 0, kind: input, shape index: {}]
  %s1 = inlined_call_operand.hbm [shape: f32[3,20,1024], index: 1, kind: output, shape index: {}]
  %s2 = sld [smem:[#allocation0]]
  $region18: #{tpu_custom_call.1} parent=0
    _
  %s4 = ssub.s32 1, %s2
  %s5 = scalar_select 0, %s4, %s2
  $region1: #{tpu_custom_call.1} parent=0
    #allocation2 [shape = 'u8[98304]{0}', space=vmem, size = 0x18000, scoped, tag = 'input window, operand 0, single buffered']
    #allocation3 [shape = 's32[1]{0}', space=sflag, size = 0x4, scoped, tag = 'scoped memory for tpu_custom_call.1']
    #allocation4 [shape = 's32[1]{0}', space=sflag, size = 0x4, scoped, tag = 'scoped memory for tpu_custom_call.1']
    #allocation5 [shape = 'u8[294912]{0}', space=vmem, size = 0x48000, scoped, tag = 'output window, operand 0, single buffered']
    %6 = vsyncpa [#allocation3], 0
    %7 = vsyncpa [#allocation4], 0
    // Predicated region
    $region2: #{tpu_custom_call.1} parent=1 // pred_check
      _
    $region3: #{tpu_custom_call.1} parent=1 // pred_check_branch
      %9 = sbr.rel (0) target = $region5
    $region4: #{tpu_custom_call.1} parent=1 // pred_region
      %11 = vsyncadd [#allocation3], 0
      %s12 = sshll.u32 %s0, 4
      %s13 = int_to_ptr.hbm [resolvable:$true] %s12
      %s14 = sshll.u32 [#allocation2], 4
      %s15 = int_to_ptr.vmem [resolvable:$true] %s14
      %20 = dma.hbm_to_vmem [thread:$0]  %s13, 3072, %s15, [#allocation3], 1024, 1024, 64
    $region5: #{tpu_custom_call.1} parent=1 // pred_fallthru
      _
    // Predicated region
    $region6: #{tpu_custom_call.1} parent=1 // pred_check
      _
    $region7: #{tpu_custom_call.1} parent=1 // pred_check_branch
      %22 = sbr.rel (0) target = $region9
    $region8: #{tpu_custom_call.1} parent=1 // pred_region
      %24 = dma.done [#allocation3], 3072
    $region9: #{tpu_custom_call.1} parent=1 // pred_fallthru
      _
    %v25 = vld [vmem:[#allocation2] sm:$0xff]
    %v26 = vld [vmem:[#allocation2 + $0x8] sm:$0xff]
    %v27 = vld [vmem:[#allocation2 + $0x10] sm:$0xff]
    %v28 = vld [vmem:[#allocation2 + $0x18] sm:$0xff]
    %v29 = vld [vmem:[#allocation2 + $0x20] sm:$0xff]
    %v30 = vld [vmem:[#allocation2 + $0x28] sm:$0xff]
    %v31 = vld [vmem:[#allocation2 + $0x30] sm:$0xff]
    %v32 = vld [vmem:[#allocation2 + $0x38] sm:$0xff]
    %v33 = vld [vmem:[#allocation2 + $0x40] sm:$0xff]
    %v34 = vld [vmem:[#allocation2 + $0x48] sm:$0xff]
    %v35 = vld [vmem:[#allocation2 + $0x50] sm:$0xff]
    %v36 = vld [vmem:[#allocation2 + $0x58] sm:$0xff]
    %v37 = vld [vmem:[#allocation2 + $0x60] sm:$0xff]
    %v38 = vld [vmem:[#allocation2 + $0x68] sm:$0xff]
    %v39 = vld [vmem:[#allocation2 + $0x70] sm:$0xff]
    %v40 = vld [vmem:[#allocation2 + $0x78] sm:$0xff]
    %v41 = vld [vmem:[#allocation2 + $0x80] sm:$0xf]
    %v42 = vld [vmem:[#allocation2 + $0x88] sm:$0xf]
    %v43 = vld [vmem:[#allocation2 + $0x90] sm:$0xf]
    %v44 = vld [vmem:[#allocation2 + $0x98] sm:$0xf]
    %v45 = vld [vmem:[#allocation2 + $0xa0] sm:$0xf]
    %v46 = vld [vmem:[#allocation2 + $0xa8] sm:$0xf]
    %v47 = vld [vmem:[#allocation2 + $0xb0] sm:$0xf]
    %v48 = vld [vmem:[#allocation2 + $0xb8] sm:$0xf]
    %49 = vst [vmem:[#allocation5] sm:$0xff] %v25
    %50 = vst [vmem:[#allocation5 + $0x8] sm:$0xff] %v26
    %51 = vst [vmem:[#allocation5 + $0x10] sm:$0xff] %v27
    %52 = vst [vmem:[#allocation5 + $0x18] sm:$0xff] %v28
    %53 = vst [vmem:[#allocation5 + $0x20] sm:$0xff] %v29
    %54 = vst [vmem:[#allocation5 + $0x28] sm:$0xff] %v30
    %55 = vst [vmem:[#allocation5 + $0x30] sm:$0xff] %v31
    %56 = vst [vmem:[#allocation5 + $0x38] sm:$0xff] %v32
    %57 = vst [vmem:[#allocation5 + $0x40] sm:$0xff] %v33
    %58 = vst [vmem:[#allocation5 + $0x48] sm:$0xff] %v34
    %59 = vst [vmem:[#allocation5 + $0x50] sm:$0xff] %v35
    %60 = vst [vmem:[#allocation5 + $0x58] sm:$0xff] %v36
    %61 = vst [vmem:[#allocation5 + $0x60] sm:$0xff] %v37
    %62 = vst [vmem:[#allocation5 + $0x68] sm:$0xff] %v38
    %63 = vst [vmem:[#allocation5 + $0x70] sm:$0xff] %v39
    %64 = vst [vmem:[#allocation5 + $0x78] sm:$0xff] %v40
    %65 = vst [vmem:[#allocation5 + $0x80] sm:$0xf] %v41
    %66 = vst [vmem:[#allocation5 + $0x88] sm:$0xf] %v42
    %67 = vst [vmem:[#allocation5 + $0x90] sm:$0xf] %v43
    %68 = vst [vmem:[#allocation5 + $0x98] sm:$0xf] %v44
    %69 = vst [vmem:[#allocation5 + $0xa0] sm:$0xf] %v45
    %70 = vst [vmem:[#allocation5 + $0xa8] sm:$0xf] %v46
    %71 = vst [vmem:[#allocation5 + $0xb0] sm:$0xf] %v47
    %72 = vst [vmem:[#allocation5 + $0xb8] sm:$0xf] %v48
    %s73 = scalar_lea.vmem [#allocation5], 192
    %74 = vst [vmem:[%s73] sm:$0xff] %v25
    %75 = vst [vmem:[%s73 + $0x8] sm:$0xff] %v26
    %76 = vst [vmem:[%s73 + $0x10] sm:$0xff] %v27
    %77 = vst [vmem:[%s73 + $0x18] sm:$0xff] %v28
    %78 = vst [vmem:[%s73 + $0x20] sm:$0xff] %v29
    %79 = vst [vmem:[%s73 + $0x28] sm:$0xff] %v30
    %80 = vst [vmem:[%s73 + $0x30] sm:$0xff] %v31
    %81 = vst [vmem:[%s73 + $0x38] sm:$0xff] %v32
    %82 = vst [vmem:[%s73 + $0x40] sm:$0xff] %v33
    %83 = vst [vmem:[%s73 + $0x48] sm:$0xff] %v34
    %84 = vst [vmem:[%s73 + $0x50] sm:$0xff] %v35
    %85 = vst [vmem:[%s73 + $0x58] sm:$0xff] %v36
    %86 = vst [vmem:[%s73 + $0x60] sm:$0xff] %v37
    %87 = vst [vmem:[%s73 + $0x68] sm:$0xff] %v38
    %88 = vst [vmem:[%s73 + $0x70] sm:$0xff] %v39
    %89 = vst [vmem:[%s73 + $0x78] sm:$0xff] %v40
    %90 = vst [vmem:[%s73 + $0x80] sm:$0xf] %v41
    %91 = vst [vmem:[%s73 + $0x88] sm:$0xf] %v42
    %92 = vst [vmem:[%s73 + $0x90] sm:$0xf] %v43
    %93 = vst [vmem:[%s73 + $0x98] sm:$0xf] %v44
    %94 = vst [vmem:[%s73 + $0xa0] sm:$0xf] %v45
    %95 = vst [vmem:[%s73 + $0xa8] sm:$0xf] %v46
    %96 = vst [vmem:[%s73 + $0xb0] sm:$0xf] %v47
    %97 = vst [vmem:[%s73 + $0xb8] sm:$0xf] %v48
    %s98 = scalar_lea.vmem [#allocation5], 384
    %99 = vst [vmem:[%s98] sm:$0xff] %v25
    %100 = vst [vmem:[%s98 + $0x8] sm:$0xff] %v26
    %101 = vst [vmem:[%s98 + $0x10] sm:$0xff] %v27
    %102 = vst [vmem:[%s98 + $0x18] sm:$0xff] %v28
    %103 = vst [vmem:[%s98 + $0x20] sm:$0xff] %v29
    %104 = vst [vmem:[%s98 + $0x28] sm:$0xff] %v30
    %105 = vst [vmem:[%s98 + $0x30] sm:$0xff] %v31
    %106 = vst [vmem:[%s98 + $0x38] sm:$0xff] %v32
    %107 = vst [vmem:[%s98 + $0x40] sm:$0xff] %v33
    %108 = vst [vmem:[%s98 + $0x48] sm:$0xff] %v34
    %109 = vst [vmem:[%s98 + $0x50] sm:$0xff] %v35
    %110 = vst [vmem:[%s98 + $0x58] sm:$0xff] %v36
    %111 = vst [vmem:[%s98 + $0x60] sm:$0xff] %v37
    %112 = vst [vmem:[%s98 + $0x68] sm:$0xff] %v38
    %113 = vst [vmem:[%s98 + $0x70] sm:$0xff] %v39
    %114 = vst [vmem:[%s98 + $0x78] sm:$0xff] %v40
    %115 = vst [vmem:[%s98 + $0x80] sm:$0xf] %v41
    %116 = vst [vmem:[%s98 + $0x88] sm:$0xf] %v42
    %117 = vst [vmem:[%s98 + $0x90] sm:$0xf] %v43
    %118 = vst [vmem:[%s98 + $0x98] sm:$0xf] %v44
    %119 = vst [vmem:[%s98 + $0xa0] sm:$0xf] %v45
    %120 = vst [vmem:[%s98 + $0xa8] sm:$0xf] %v46
    %121 = vst [vmem:[%s98 + $0xb0] sm:$0xf] %v47
    %122 = vst [vmem:[%s98 + $0xb8] sm:$0xf] %v48
    // Predicated region
    $region10: #{tpu_custom_call.1} parent=1 // pred_check
      _
    $region11: #{tpu_custom_call.1} parent=1 // pred_check_branch
      %124 = sbr.rel (0) target = $region13
    $region12: #{tpu_custom_call.1} parent=1 // pred_region
      %126 = vsyncadd [#allocation4], 0
      %s127 = sshll.u32 [#allocation5], 4
      %s128 = int_to_ptr.vmem [resolvable:$true] %s127
      %s129 = sshll.u32 %s1, 4
      %s130 = int_to_ptr.hbm [resolvable:$true] %s129
      %135 = dma.vmem_to_hbm [thread:$0]  %s128, 9216, %s130, [#allocation4], 1024, 1024, 64
    $region13: #{tpu_custom_call.1} parent=1 // pred_fallthru
      _
    // Predicated region
    $region14: #{tpu_custom_call.1} parent=1 // pred_check
      _
    $region15: #{tpu_custom_call.1} parent=1 // pred_check_branch
      %137 = sbr.rel (0) target = $region17
    $region16: #{tpu_custom_call.1} parent=1 // pred_region
      %139 = dma.done [#allocation4], 9216
    $region17: #{tpu_custom_call.1} parent=1 // pred_fallthru
      _
    %140 = vsyncpa [#allocation3], 1
    %141 = vsyncpa [#allocation4], 1

</llo_original>
